<compile_context>
chip_gen: v7x
topology: tpu7x:2x2x1
jax: 0.10.0
libtpu: 0.0.40
codegen_flags: <defaults>
</compile_context>

<pallas_src>
import jax
import jax.numpy as jnp
from jax.experimental import pallas as pl
from jax.experimental.pallas import tpu as pltpu

ID2DISEASE = ['adhd', 'anxiety', 'bipolar', 'depression', 'mdd', 'ocd', 'ppd',
              'ptsd', 'neg']
N_CLASSES = len(ID2DISEASE)   # 9
N_PAD = 128                   # lane-dense padded logits width
F_IN = 38
F_PAD = 128                   # lane-dense padded input-feature width
H1 = 512
H2 = 256


def _round_up(x, m):
    return ((x + m - 1) // m) * m


def _cdiv(a, b):
    return -(-a // b)


def symptom_stream_kernel(x_ref, w1_ref, b1_ref, w2_ref, b2_ref,
                          w3_ref, b3_ref, out_ref):
    # x_ref: (TB, F_PAD) bf16 -- posts-mean already computed in the wrapper.
    # Linear(38 -> 512) (K lane-padded to 128) + bias + ReLU on f32 acc.
    h1 = jnp.dot(x_ref[...], w1_ref[...], preferred_element_type=jnp.float32)
    h1 = jnp.maximum(h1 + b1_ref[...], 0.0)

    # Linear(512 -> 256) + bias + ReLU.
    h2 = jnp.dot(h1.astype(jnp.bfloat16), w2_ref[...],
                 preferred_element_type=jnp.float32)
    h2 = jnp.maximum(h2 + b2_ref[...], 0.0)

    # Linear(256 -> 9), lane-padded to 128 output columns; bf16 store.
    logits = jnp.dot(h2.astype(jnp.bfloat16), w3_ref[...],
                     preferred_element_type=jnp.float32)
    out_ref[...] = (logits + b3_ref[...]).astype(out_ref.dtype)


def symptom_stream_forward(symp, w1, b1, w2, b2, w3, b3, *,
                           tb_max=1024, min_tiles=2):
    """symp: (B, P, 38) f32.  Weights stored (in_features, out_features)."""
    B, P, F = symp.shape
    assert F == F_IN

    # --- host-side prep (weights would normally be prepped once) ----------
    # Lane-pad W1's K dim to 128 and the classifier's N dim to 128 so every
    # matmul operand / output is lane-dense.  Matmul inputs in bf16 (2x MXU
    # rate, half the weight bytes) with f32 accumulation; biases stay f32.
    w1p = jnp.zeros((F_PAD, H1), jnp.bfloat16).at[:F_IN, :].set(
        w1.astype(jnp.bfloat16))
    w2b = w2.astype(jnp.bfloat16)
    w3p = jnp.zeros((H2, N_PAD), jnp.bfloat16).at[:, :N_CLASSES].set(
        w3.astype(jnp.bfloat16))
    b1r = b1.reshape(1, H1).astype(jnp.float32)
    b2r = b2.reshape(1, H2).astype(jnp.float32)
    b3p = jnp.zeros((1, N_PAD), jnp.float32).at[:, :N_CLASSES].set(b3)

    # Batch tile: bound padding waste (<= 8*n_tiles rows), amortize per-step
    # overhead (tile up to 1024), and keep >= 2 grid steps so the parallel
    # batch axis shards across both TensorCores on v7x.
    n_tiles = max(min_tiles, _cdiv(B, tb_max))
    tb = _round_up(_cdiv(B, n_tiles), 8)
    b_pad = tb * n_tiles
    grid = (n_tiles,)

    # Posts-mean + batch/feature pad + bf16 cast: one small fused XLA pass
    # producing the (b_pad, 128) bf16 kernel input (no P-wide kernel input,
    # no separate full-symp cast round-trip).
    x = symp.mean(axis=1)                                           # (B, 38) f32
    x = jnp.pad(x, ((0, b_pad - B), (0, F_PAD - F))).astype(jnp.bfloat16)

    const = lambda i: (0, 0)   # weights / biases: same block every step
    flops = 2 * b_pad * (F_PAD * H1 + H1 * H2 + H2 * N_PAD)
    bytes_accessed = (x.size * 2
                      + (w1p.size + w2b.size + w3p.size) * 2
                      + (b1r.size + b2r.size + b3p.size) * 4
                      + b_pad * N_PAD * 2)

    out = pl.pallas_call(
        symptom_stream_kernel,
        out_shape=jax.ShapeDtypeStruct((b_pad, N_PAD), jnp.bfloat16),
        grid=grid,
        in_specs=[
            pl.BlockSpec((tb, F_PAD), lambda i: (i, 0)),   # batch-tiled input
            pl.BlockSpec((F_PAD, H1), const),              # VMEM-resident weights
            pl.BlockSpec((1, H1), const),
            pl.BlockSpec((H1, H2), const),
            pl.BlockSpec((1, H2), const),
            pl.BlockSpec((H2, N_PAD), const),
            pl.BlockSpec((1, N_PAD), const),
        ],
        out_specs=pl.BlockSpec((tb, N_PAD), lambda i: (i, 0)),
        compiler_params=pltpu.CompilerParams(
            dimension_semantics=("parallel",)),
        cost_estimate=pl.CostEstimate(
            flops=flops, transcendentals=0, bytes_accessed=bytes_accessed),
    )(x, w1p, b1r, w2b, b2r, w3p, b3p)

    # Slice padding off and hand back f32 logits for downstream use.
    return out[:B, :N_CLASSES].astype(jnp.float32)


def init_params(key):
    """Deterministic init mimicking torch.nn.Linear (uniform +/- 1/sqrt(fan_in))."""
    ks = jax.random.split(key, 6)

    def linear(kw, kb, fan_in, fan_out):
        bound = 1.0 / jnp.sqrt(fan_in)
        w = jax.random.uniform(kw, (fan_in, fan_out), jnp.float32, -bound, bound)
        b = jax.random.uniform(kb, (fan_out,), jnp.float32, -bound, bound)
        return w, b

    w1, b1 = linear(ks[0], ks[1], F_IN, H1)
    w2, b2 = linear(ks[2], ks[3], H1, H2)
    w3, b3 = linear(ks[4], ks[5], H2, N_CLASSES)
    return w1, b1, w2, b2, w3, b3


if __name__ == "__main__":
    key = jax.random.PRNGKey(0)
    k_data, k_params = jax.random.split(key)

    B, P = 2, 8           # batch of 2 users, 8 posts each, 38 symptom features
    symp = jax.random.normal(k_data, (B, P, F_IN), dtype=jnp.float32)

    params = init_params(k_params)

    logits = symptom_stream_forward(symp, *params)
    jax.block_until_ready(logits)

    # Sanity check against a pure-JAX f32 reference of the same forward pass.
    # (Kernel uses bf16 matmul inputs / bf16 logits store with f32
    #  accumulation -> loose tolerance.)
    x = symp.mean(axis=1)
    w1, b1, w2, b2, w3, b3 = params
    h1 = jnp.maximum(x @ w1 + b1, 0.0)
    h2 = jnp.maximum(h1 @ w2 + b2, 0.0)
    ref = h2 @ w3 + b3
    assert logits.shape == (B, N_CLASSES)
    assert jnp.allclose(logits, ref, atol=2e-2, rtol=5e-2), (
        float(jnp.max(jnp.abs(logits - ref))))

    print("KERNEL_OK")
</pallas_src>

<mosaic_0001>
module attributes {stable_mosaic.version = 11 : i64} {
  func.func @symptom_stream_kernel(%arg0: i32, %arg1: memref<8x128xbf16, #tpu.memory_space<vmem>>, %arg2: memref<128x512xbf16, #tpu.memory_space<vmem>>, %arg3: memref<1x512xf32, #tpu.memory_space<vmem>>, %arg4: memref<512x256xbf16, #tpu.memory_space<vmem>>, %arg5: memref<1x256xf32, #tpu.memory_space<vmem>>, %arg6: memref<256x128xbf16, #tpu.memory_space<vmem>>, %arg7: memref<1x128xf32, #tpu.memory_space<vmem>>, %arg8: memref<8x128xbf16, #tpu.memory_space<vmem>>) attributes {dimension_semantics = [#tpu.dimension_semantics<parallel>], iteration_bounds = array<i64: 2>, scalar_prefetch = 0 : i64, scratch_operands = 0 : i64, tpu.core_type = #tpu.core_type<tc>, window_params = [{transform_indices = @transform_0, window_bounds = array<i64: 8, 128>}, {pipeline_mode = #tpu.pipeline_mode<synchronous>, transform_indices = @transform_1, window_bounds = array<i64: 128, 512>}, {pipeline_mode = #tpu.pipeline_mode<synchronous>, transform_indices = @transform_2, window_bounds = array<i64: 1, 512>}, {pipeline_mode = #tpu.pipeline_mode<synchronous>, transform_indices = @transform_3, window_bounds = array<i64: 512, 256>}, {pipeline_mode = #tpu.pipeline_mode<synchronous>, transform_indices = @transform_4, window_bounds = array<i64: 1, 256>}, {pipeline_mode = #tpu.pipeline_mode<synchronous>, transform_indices = @transform_5, window_bounds = array<i64: 256, 128>}, {pipeline_mode = #tpu.pipeline_mode<synchronous>, transform_indices = @transform_6, window_bounds = array<i64: 1, 128>}, {transform_indices = @transform_7, window_bounds = array<i64: 8, 128>}]} {
    %c0 = arith.constant 0 : index
    %c0_0 = arith.constant 0 : index
    %0 = vector.load %arg1[%c0, %c0_0] : memref<8x128xbf16, #tpu.memory_space<vmem>>, vector<8x128xbf16>
    %c0_1 = arith.constant 0 : index
    %c0_2 = arith.constant 0 : index
    %1 = vector.load %arg2[%c0_1, %c0_2] : memref<128x512xbf16, #tpu.memory_space<vmem>>, vector<128x512xbf16>
    %cst = arith.constant dense<0.000000e+00> : vector<8x512xf32>
    %2 = tpu.matmul %0, %1, %cst {dimension_numbers = #tpu.dot_dimension_numbers<[1], [0], [0], [1], [0, 0, 1, 1], [], []>} : vector<8x128xbf16>, vector<128x512xbf16>, vector<8x512xf32> -> vector<8x512xf32>
    %c0_3 = arith.constant 0 : index
    %c0_4 = arith.constant 0 : index
    %3 = vector.load %arg3[%c0_3, %c0_4] : memref<1x512xf32, #tpu.memory_space<vmem>>, vector<1x512xf32>
    %4 = vector.broadcast %3 : vector<1x512xf32> to vector<8x512xf32>
    %5 = arith.addf %2, %4 : vector<8x512xf32>
    %cst_5 = arith.constant 0.000000e+00 : f32
    %6 = vector.broadcast %cst_5 : f32 to vector<8x512xf32>
    %7 = arith.maximumf %5, %6 : vector<8x512xf32>
    %8 = arith.truncf %7 : vector<8x512xf32> to vector<8x512xbf16>
    %c0_6 = arith.constant 0 : index
    %c0_7 = arith.constant 0 : index
    %9 = vector.load %arg4[%c0_6, %c0_7] : memref<512x256xbf16, #tpu.memory_space<vmem>>, vector<512x256xbf16>
    %cst_8 = arith.constant dense<0.000000e+00> : vector<8x256xf32>
    %10 = tpu.matmul %8, %9, %cst_8 {dimension_numbers = #tpu.dot_dimension_numbers<[1], [0], [0], [1], [0, 0, 1, 1], [], []>} : vector<8x512xbf16>, vector<512x256xbf16>, vector<8x256xf32> -> vector<8x256xf32>
    %c0_9 = arith.constant 0 : index
    %c0_10 = arith.constant 0 : index
    %11 = vector.load %arg5[%c0_9, %c0_10] : memref<1x256xf32, #tpu.memory_space<vmem>>, vector<1x256xf32>
    %12 = vector.broadcast %11 : vector<1x256xf32> to vector<8x256xf32>
    %13 = arith.addf %10, %12 : vector<8x256xf32>
    %cst_11 = arith.constant 0.000000e+00 : f32
    %14 = vector.broadcast %cst_11 : f32 to vector<8x256xf32>
    %15 = arith.maximumf %13, %14 : vector<8x256xf32>
    %16 = arith.truncf %15 : vector<8x256xf32> to vector<8x256xbf16>
    %c0_12 = arith.constant 0 : index
    %c0_13 = arith.constant 0 : index
    %17 = vector.load %arg6[%c0_12, %c0_13] : memref<256x128xbf16, #tpu.memory_space<vmem>>, vector<256x128xbf16>
    %cst_14 = arith.constant dense<0.000000e+00> : vector<8x128xf32>
    %18 = tpu.matmul %16, %17, %cst_14 {dimension_numbers = #tpu.dot_dimension_numbers<[1], [0], [0], [1], [0, 0, 1, 1], [], []>} : vector<8x256xbf16>, vector<256x128xbf16>, vector<8x128xf32> -> vector<8x128xf32>
    %c0_15 = arith.constant 0 : index
    %c0_16 = arith.constant 0 : index
    %19 = vector.load %arg7[%c0_15, %c0_16] : memref<1x128xf32, #tpu.memory_space<vmem>>, vector<1x128xf32>
    %20 = vector.broadcast %19 : vector<1x128xf32> to vector<8x128xf32>
    %21 = arith.addf %18, %20 : vector<8x128xf32>
    %22 = arith.truncf %21 : vector<8x128xf32> to vector<8x128xbf16>
    %c0_17 = arith.constant 0 : index
    %c0_18 = arith.constant 0 : index
    %23 = vector.load %arg8[%c0_17, %c0_18] : memref<8x128xbf16, #tpu.memory_space<vmem>>, vector<8x128xbf16>
    tpu.vector_store %arg8[%c0_17, %c0_18], %22 {strides = array<i32>} : memref<8x128xbf16, #tpu.memory_space<vmem>>, vector<8x128xbf16>,
    return
  }
  func.func @transform_0(%arg0: i32) -> (i32, i32) {
    %c0_i32 = arith.constant 0 : i32
    %c0_i32_0 = arith.constant 0 : i32
    return %arg0, %c0_i32 : i32, i32
  }
  func.func @transform_1(%arg0: i32) -> (i32, i32) {
    %c0_i32 = arith.constant 0 : i32
    %c0_i32_0 = arith.constant 0 : i32
    %c0_i32_1 = arith.constant 0 : i32
    return %c0_i32, %c0_i32_0 : i32, i32
  }
  func.func @transform_2(%arg0: i32) -> (i32, i32) {
    %c0_i32 = arith.constant 0 : i32
    %c0_i32_0 = arith.constant 0 : i32
    %c0_i32_1 = arith.constant 0 : i32
    return %c0_i32, %c0_i32_0 : i32, i32
  }
  func.func @transform_3(%arg0: i32) -> (i32, i32) {
    %c0_i32 = arith.constant 0 : i32
    %c0_i32_0 = arith.constant 0 : i32
    %c0_i32_1 = arith.constant 0 : i32
    return %c0_i32, %c0_i32_0 : i32, i32
  }
  func.func @transform_4(%arg0: i32) -> (i32, i32) {
    %c0_i32 = arith.constant 0 : i32
    %c0_i32_0 = arith.constant 0 : i32
    %c0_i32_1 = arith.constant 0 : i32
    return %c0_i32, %c0_i32_0 : i32, i32
  }
  func.func @transform_5(%arg0: i32) -> (i32, i32) {
    %c0_i32 = arith.constant 0 : i32
    %c0_i32_0 = arith.constant 0 : i32
    %c0_i32_1 = arith.constant 0 : i32
    return %c0_i32, %c0_i32_0 : i32, i32
  }
  func.func @transform_6(%arg0: i32) -> (i32, i32) {
    %c0_i32 = arith.constant 0 : i32
    %c0_i32_0 = arith.constant 0 : i32
    %c0_i32_1 = arith.constant 0 : i32
    return %c0_i32, %c0_i32_0 : i32, i32
  }
  func.func @transform_7(%arg0: i32) -> (i32, i32) {
    %c0_i32 = arith.constant 0 : i32
    %c0_i32_0 = arith.constant 0 : i32
    return %arg0, %c0_i32 : i32, i32
  }
}

</mosaic_0001>

<llo_original>
// kernel: tpu_custom_call.1
$region0: #{tpu_custom_call.1}
  #allocation0 [shape = 'u32[]', space=smem, size = 0x4, offset = 0x4, fixed_abs, tag = 'smem constant byte address 0x4 - core index']
  #allocation1 [shape = 'u32[144,128]{1,0:T(1,128)}', space=vmem, size = 0x12000, scoped, tag = 'internal scratch']
  %s0 = inlined_call_operand.hbm [shape: bf16[16,128], index: 0, kind: input, shape index: {}]
  %s1 = inlined_call_operand.hbm [shape: bf16[128,512], index: 1, kind: input, shape index: {}]
  %s2 = inlined_call_operand.vmem [shape: f32[1,512], index: 2, kind: input, shape index: {}]
  %s3 = inlined_call_operand.hbm [shape: bf16[512,256], index: 3, kind: input, shape index: {}]
  %s4 = inlined_call_operand.vmem [shape: f32[1,256], index: 4, kind: input, shape index: {}]
  %s5 = inlined_call_operand.hbm [shape: bf16[256,128], index: 5, kind: input, shape index: {}]
  %s6 = inlined_call_operand.vmem [shape: f32[1,128], index: 6, kind: input, shape index: {}]
  %s7 = inlined_call_operand.hbm [shape: bf16[16,128], index: 7, kind: output, shape index: {}]
  %s8 = sld [smem:[#allocation0]]
  $region77: #{tpu_custom_call.1} parent=0
    _
  %s10 = ssub.s32 1, %s8
  %s11 = scalar_select 0, %s10, %s8
  $region1: #{tpu_custom_call.1} parent=0
    #allocation2 [shape = 'u8[4096]{0}', space=vmem, size = 0x1000, scoped, tag = 'input window, operand 0']
    #allocation3 [shape = 's32[2]{0}', space=sflag, size = 0x8, scoped, tag = 'scoped memory for tpu_custom_call.1']
    #allocation4 [shape = 's32[2]{0}', space=sflag, size = 0x8, scoped, tag = 'scoped memory for tpu_custom_call.1']
    #allocation5 [shape = 'u8[131072]{0}', space=vmem, size = 0x20000, scoped, tag = 'input window, operand 1, single buffered']
    #allocation6 [shape = 's32[1]{0}', space=sflag, size = 0x4, scoped, tag = 'scoped memory for tpu_custom_call.1']
    #allocation7 [shape = 'u8[262144]{0}', space=vmem, size = 0x40000, scoped, tag = 'input window, operand 3, single buffered']
    #allocation8 [shape = 'u8[65536]{0}', space=vmem, size = 0x10000, scoped, tag = 'input window, operand 5, single buffered']
    #allocation9 [shape = 's32[1]{0}', space=sflag, size = 0x4, scoped, tag = 'scoped memory for tpu_custom_call.1']
    #allocation10 [shape = 'u8[4096]{0}', space=vmem, size = 0x1000, scoped, tag = 'output window, operand 0']
    %12 = vsyncpa [#allocation3], 0
    %s13 = scalar_lea.sflag [#allocation3], 1
    %14 = vsyncpa %s13, 0
    %15 = vsyncpa [#allocation6], 0
    %16 = vsyncpa [#allocation9], 0
    %17 = vsyncpa [#allocation4], 0
    %s18 = scalar_lea.sflag [#allocation4], 1
    %19 = vsyncpa %s18, 0
    loop: start=0, step=1, limit=4
    $region2: #{tpu_custom_call.1} parent=1 // loop_pre_header
      _
    $region3: #{tpu_custom_call.1} parent=1 // loop_header
      %s21 = sphi 0, %s25
      %p22 = scmp.ge.s32.totalorder %s21, 4
      %s31 = sphi 0, %s33
      %s34 = sphi 0, %s31
      %s35 = sphi 0, %s34
      %s51 = sphi 0, %s35
      %s55 = sphi 0, %s55
      %s57 = sphi 0, %s55
      %s58 = sphi 0, %s57
      %s72 = sphi 0, %s58
      %s76 = sphi 0, %s76
      %s78 = sphi 0, %s76
      %s79 = sphi 0, %s78
      %s93 = sphi 0, %s79
      %s97 = sphi 0, %s97
      %s99 = sphi 0, %s97
      %s100 = sphi 0, %s99
      %s114 = sphi 0, %s100
      %s118 = sphi 0, %s118
      %s120 = sphi 0, %s118
      %s121 = sphi 0, %s120
      %s135 = sphi 0, %s121
      %s139 = sphi 0, %s139
      %s141 = sphi 0, %s139
      %s142 = sphi 0, %s141
      %s156 = sphi 0, %s142
      %s160 = sphi 0, %s160
      %s162 = sphi 0, %s160
      %s163 = sphi 0, %s162
      %s177 = sphi 0, %s163
      %s183 = sphi 0, %s185
      %s186 = sphi 0, %s183
      %s187 = sphi 0, %s186
      %s203 = sphi 0, %s187
    $region4: #{tpu_custom_call.1} parent=1 // loop_header_branch
      %24 = sbr.rel (%p22) target = $region8
    $region5: #{tpu_custom_call.1} parent=1 // loop_body
      %s26 = ssub.s32 %s21, 1
      %s27 = ssub.s32 %s21, 2
      %s28 = sadd.s32 %s21, 1
      %s29 = ssub.s32 %s21, %s28
      %p30 = scmp.eq.s32.totalorder %s29, 0
      %s32 = sadd.s32 %s31, 1
      %s33 = scalar_select %p30, %s31, %s32
      %p36 = pneg %p30
      %p37 = scmp.eq.s32.totalorder %s21, 1
      %p38 = por %p36, %p37
      %p39 = scmp.ne.s32.totalorder %s31, %s34
      %p40 = scmp.eq.s32.totalorder %s21, 0
      %p41 = por %p39, %p40
      %p42 = scmp.ne.s32.totalorder %s31, %s34
      %p43 = scmp.eq.s32.totalorder %s26, 1
      %p44 = por %p42, %p43
      %p45 = scmp.ne.s32.totalorder %s34, %s35
      %p46 = scmp.eq.s32.totalorder %s26, 0
      %p47 = por %p45, %p46
      %p48 = scmp.ne.s32.totalorder %s34, %s35
      %p49 = scmp.eq.s32.totalorder %s27, 1
      %p50 = por %p48, %p49
      %p52 = scmp.ne.s32.totalorder %s35, %s51
      %p53 = scmp.eq.s32.totalorder %s27, 0
      %p54 = por %p52, %p53
      %s56 = sadd.s32 %s55, 1
      %p59 = scmp.eq.s32.totalorder %s21, 1
      %p60 = scmp.ne.s32.totalorder %s55, %s57
      %p61 = scmp.eq.s32.totalorder %s21, 0
      %p62 = por %p60, %p61
      %p63 = scmp.ne.s32.totalorder %s55, %s57
      %p64 = scmp.eq.s32.totalorder %s26, 1
      %p65 = por %p63, %p64
      %p66 = scmp.ne.s32.totalorder %s57, %s58
      %p67 = scmp.eq.s32.totalorder %s26, 0
      %p68 = por %p66, %p67
      %p69 = scmp.ne.s32.totalorder %s57, %s58
      %p70 = scmp.eq.s32.totalorder %s27, 1
      %p71 = por %p69, %p70
      %p73 = scmp.ne.s32.totalorder %s58, %s72
      %p74 = scmp.eq.s32.totalorder %s27, 0
      %p75 = por %p73, %p74
      %s77 = sadd.s32 %s76, 1
      %p80 = scmp.eq.s32.totalorder %s21, 1
      %p81 = scmp.ne.s32.totalorder %s76, %s78
      %p82 = scmp.eq.s32.totalorder %s21, 0
      %p83 = por %p81, %p82
      %p84 = scmp.ne.s32.totalorder %s76, %s78
      %p85 = scmp.eq.s32.totalorder %s26, 1
      %p86 = por %p84, %p85
      %p87 = scmp.ne.s32.totalorder %s78, %s79
      %p88 = scmp.eq.s32.totalorder %s26, 0
      %p89 = por %p87, %p88
      %p90 = scmp.ne.s32.totalorder %s78, %s79
      %p91 = scmp.eq.s32.totalorder %s27, 1
      %p92 = por %p90, %p91
      %p94 = scmp.ne.s32.totalorder %s79, %s93
      %p95 = scmp.eq.s32.totalorder %s27, 0
      %p96 = por %p94, %p95
      %s98 = sadd.s32 %s97, 1
      %p101 = scmp.eq.s32.totalorder %s21, 1
      %p102 = scmp.ne.s32.totalorder %s97, %s99
      %p103 = scmp.eq.s32.totalorder %s21, 0
      %p104 = por %p102, %p103
      %p105 = scmp.ne.s32.totalorder %s97, %s99
      %p106 = scmp.eq.s32.totalorder %s26, 1
      %p107 = por %p105, %p106
      %p108 = scmp.ne.s32.totalorder %s99, %s100
      %p109 = scmp.eq.s32.totalorder %s26, 0
      %p110 = por %p108, %p109
      %p111 = scmp.ne.s32.totalorder %s99, %s100
      %p112 = scmp.eq.s32.totalorder %s27, 1
      %p113 = por %p111, %p112
      %p115 = scmp.ne.s32.totalorder %s100, %s114
      %p116 = scmp.eq.s32.totalorder %s27, 0
      %p117 = por %p115, %p116
      %s119 = sadd.s32 %s118, 1
      %p122 = scmp.eq.s32.totalorder %s21, 1
      %p123 = scmp.ne.s32.totalorder %s118, %s120
      %p124 = scmp.eq.s32.totalorder %s21, 0
      %p125 = por %p123, %p124
      %p126 = scmp.ne.s32.totalorder %s118, %s120
      %p127 = scmp.eq.s32.totalorder %s26, 1
      %p128 = por %p126, %p127
      %p129 = scmp.ne.s32.totalorder %s120, %s121
      %p130 = scmp.eq.s32.totalorder %s26, 0
      %p131 = por %p129, %p130
      %p132 = scmp.ne.s32.totalorder %s120, %s121
      %p133 = scmp.eq.s32.totalorder %s27, 1
      %p134 = por %p132, %p133
      %p136 = scmp.ne.s32.totalorder %s121, %s135
      %p137 = scmp.eq.s32.totalorder %s27, 0
      %p138 = por %p136, %p137
      %s140 = sadd.s32 %s139, 1
      %p143 = scmp.eq.s32.totalorder %s21, 1
      %p144 = scmp.ne.s32.totalorder %s139, %s141
      %p145 = scmp.eq.s32.totalorder %s21, 0
      %p146 = por %p144, %p145
      %p147 = scmp.ne.s32.totalorder %s139, %s141
      %p148 = scmp.eq.s32.totalorder %s26, 1
      %p149 = por %p147, %p148
      %p150 = scmp.ne.s32.totalorder %s141, %s142
      %p151 = scmp.eq.s32.totalorder %s26, 0
      %p152 = por %p150, %p151
      %p153 = scmp.ne.s32.totalorder %s141, %s142
      %p154 = scmp.eq.s32.totalorder %s27, 1
      %p155 = por %p153, %p154
      %p157 = scmp.ne.s32.totalorder %s142, %s156
      %p158 = scmp.eq.s32.totalorder %s27, 0
      %p159 = por %p157, %p158
      %s161 = sadd.s32 %s160, 1
      %p164 = scmp.eq.s32.totalorder %s21, 1
      %p165 = scmp.ne.s32.totalorder %s160, %s162
      %p166 = scmp.eq.s32.totalorder %s21, 0
      %p167 = por %p165, %p166
      %p168 = scmp.ne.s32.totalorder %s160, %s162
      %p169 = scmp.eq.s32.totalorder %s26, 1
      %p170 = por %p168, %p169
      %p171 = scmp.ne.s32.totalorder %s162, %s163
      %p172 = scmp.eq.s32.totalorder %s26, 0
      %p173 = por %p171, %p172
      %p174 = scmp.ne.s32.totalorder %s162, %s163
      %p175 = scmp.eq.s32.totalorder %s27, 1
      %p176 = por %p174, %p175
      %p178 = scmp.ne.s32.totalorder %s163, %s177
      %p179 = scmp.eq.s32.totalorder %s27, 0
      %p180 = por %p178, %p179
      %s181 = ssub.s32 %s21, %s28
      %p182 = scmp.eq.s32.totalorder %s181, 0
      %s184 = sadd.s32 %s183, 1
      %s185 = scalar_select %p182, %s183, %s184
      %p188 = pneg %p182
      %p189 = scmp.eq.s32.totalorder %s21, 1
      %p190 = por %p188, %p189
      %p191 = scmp.ne.s32.totalorder %s183, %s186
      %p192 = scmp.eq.s32.totalorder %s21, 0
      %p193 = por %p191, %p192
      %p194 = scmp.ne.s32.totalorder %s183, %s186
      %p195 = scmp.eq.s32.totalorder %s26, 1
      %p196 = por %p194, %p195
      %p197 = scmp.ne.s32.totalorder %s186, %s187
      %p198 = scmp.eq.s32.totalorder %s26, 0
      %p199 = por %p197, %p198
      %p200 = scmp.ne.s32.totalorder %s186, %s187
      %p201 = scmp.eq.s32.totalorder %s27, 1
      %p202 = por %p200, %p201
      %p204 = scmp.ne.s32.totalorder %s187, %s203
      %p205 = scmp.eq.s32.totalorder %s27, 0
      %p206 = por %p204, %p205
      %p207 = scmp.le.s32.totalorder 1, %s21
      %p208 = scmp.lt.s32.totalorder %s21, 3
      %p209 = pnand %p207, %p208
      %p210 = pneg %p209
      // Predicated region
      $region9: #{tpu_custom_call.1} parent=5 // pred_check
        _
      $region10: #{tpu_custom_call.1} parent=5 // pred_check_branch
        %212 = sbr.rel (%p209) target = $region12
      $region11: #{tpu_custom_call.1} parent=5 // pred_region
        %s213 = ssub.s32 %s21, 1
        // Predicated region
        $region13: #{tpu_custom_call.1} parent=11 // pred_check
          %p214 = pneg %p68
        $region14: #{tpu_custom_call.1} parent=11 // pred_check_branch
          %216 = sbr.rel (%p214) target = $region16
        $region15: #{tpu_custom_call.1} parent=11 // pred_region
          %s218 = ssub.s32 4096, 4096
          %219 = vsyncadd [#allocation6], %s218
          %s220 = sshll.u32 [#allocation5], 4
          %s221 = int_to_ptr.vmem [resolvable:$true] %s220
          %226 = dma.hbm_to_vmem [thread:$0]  %s1, 4096, %s221, [#allocation6], 256, 256, 16
        $region16: #{tpu_custom_call.1} parent=11 // pred_fallthru
          _
        // Predicated region
        $region17: #{tpu_custom_call.1} parent=11 // pred_check
          %p227 = pneg %p89
        $region18: #{tpu_custom_call.1} parent=11 // pred_check_branch
          %229 = sbr.rel (%p227) target = $region20
        $region19: #{tpu_custom_call.1} parent=11 // pred_region
          _
        $region20: #{tpu_custom_call.1} parent=11 // pred_fallthru
          _
        // Predicated region
        $region21: #{tpu_custom_call.1} parent=11 // pred_check
          %p230 = pneg %p110
        $region22: #{tpu_custom_call.1} parent=11 // pred_check_branch
          %232 = sbr.rel (%p230) target = $region24
        $region23: #{tpu_custom_call.1} parent=11 // pred_region
          %s234 = ssub.s32 8192, 8192
          %235 = vsyncadd [#allocation6], %s234
          %s236 = sshll.u32 [#allocation7], 4
          %s237 = int_to_ptr.vmem [resolvable:$true] %s236
          %242 = dma.hbm_to_vmem [thread:$0]  %s3, 8192, %s237, [#allocation6], 128, 128, 8
        $region24: #{tpu_custom_call.1} parent=11 // pred_fallthru
          _
        // Predicated region
        $region25: #{tpu_custom_call.1} parent=11 // pred_check
          %p243 = pneg %p131
        $region26: #{tpu_custom_call.1} parent=11 // pred_check_branch
          %245 = sbr.rel (%p243) target = $region28
        $region27: #{tpu_custom_call.1} parent=11 // pred_region
          _
        $region28: #{tpu_custom_call.1} parent=11 // pred_fallthru
          _
        // Predicated region
        $region29: #{tpu_custom_call.1} parent=11 // pred_check
          %p246 = pneg %p152
        $region30: #{tpu_custom_call.1} parent=11 // pred_check_branch
          %248 = sbr.rel (%p246) target = $region32
        $region31: #{tpu_custom_call.1} parent=11 // pred_region
          %s250 = ssub.s32 2048, 2048
          %251 = vsyncadd [#allocation9], %s250
          %s252 = sshll.u32 [#allocation8], 4
          %s253 = int_to_ptr.vmem [resolvable:$true] %s252
          %258 = dma.hbm_to_vmem [thread:$0]  %s5, 2048, %s253, [#allocation9], 64, 64, 4
        $region32: #{tpu_custom_call.1} parent=11 // pred_fallthru
          _
        // Predicated region
        $region33: #{tpu_custom_call.1} parent=11 // pred_check
          %p259 = pneg %p173
        $region34: #{tpu_custom_call.1} parent=11 // pred_check_branch
          %261 = sbr.rel (%p259) target = $region36
        $region35: #{tpu_custom_call.1} parent=11 // pred_region
          _
        $region36: #{tpu_custom_call.1} parent=11 // pred_fallthru
          _
      $region12: #{tpu_custom_call.1} parent=5 // pred_fallthru
        _
      %p262 = scmp.lt.s32.totalorder %s21, 2
      // Predicated region
      $region37: #{tpu_custom_call.1} parent=5 // pred_check
        %p263 = pneg %p262
      $region38: #{tpu_custom_call.1} parent=5 // pred_check_branch
        %265 = sbr.rel (%p263) target = $region40
      $region39: #{tpu_custom_call.1} parent=5 // pred_region
        // Predicated region
        $region41: #{tpu_custom_call.1} parent=39 // pred_check
          %p266 = pneg %p41
        $region42: #{tpu_custom_call.1} parent=39 // pred_check_branch
          %268 = sbr.rel (%p266) target = $region44
        $region43: #{tpu_custom_call.1} parent=39 // pred_region
          %s269 = sand.u32 %s31, 1
          %s270 = scalar_lea.sflag [#allocation3], %s269
          %s271 = sand.u32 %s31, 1
          %s272 = smul.addr %s271, 4
          %s273 = scalar_lea.vmem [#allocation2], %s272
          %s275 = ssub.s32 64, 64
          %276 = vsyncadd %s270, %s275
          %s277 = smul.addr %s21, 64
          %s278 = scalar_lea.hbm %s0, %s277
          %s280 = sshll.u32 %s273, 4
          %s281 = int_to_ptr.vmem [resolvable:$true] %s280
          %283 = dma.hbm_to_vmem [thread:$0]  %s278, 64, %s281, %s270
        $region44: #{tpu_custom_call.1} parent=39 // pred_fallthru
          _
      $region40: #{tpu_custom_call.1} parent=5 // pred_fallthru
        _
      %p284 = scmp.le.s32.totalorder 1, %s21
      %p285 = scmp.lt.s32.totalorder %s21, 3
      %p286 = pnand %p284, %p285
      %p287 = pneg %p286
      // Predicated region
      $region45: #{tpu_custom_call.1} parent=5 // pred_check
        _
      $region46: #{tpu_custom_call.1} parent=5 // pred_check_branch
        %289 = sbr.rel (%p286) target = $region48
      $region47: #{tpu_custom_call.1} parent=5 // pred_region
        %s290 = ssub.s32 %s21, 1
        %s291 = sand.u32 %s34, 1
        %s292 = scalar_lea.sflag [#allocation3], %s291
        %s293 = sand.u32 %s34, 1
        %s294 = smul.addr %s293, 4
        %s295 = scalar_lea.vmem [#allocation2], %s294
        // Predicated region
        $region49: #{tpu_custom_call.1} parent=47 // pred_check
          %p296 = pneg %p47
        $region50: #{tpu_custom_call.1} parent=47 // pred_check_branch
          %298 = sbr.rel (%p296) target = $region52
        $region51: #{tpu_custom_call.1} parent=47 // pred_region
          %299 = dma.done %s292, 64
        $region52: #{tpu_custom_call.1} parent=47 // pred_fallthru
          _
        // Predicated region
        $region53: #{tpu_custom_call.1} parent=47 // pred_check
          %p300 = pneg %p68
        $region54: #{tpu_custom_call.1} parent=47 // pred_check_branch
          %302 = sbr.rel (%p300) target = $region56
        $region55: #{tpu_custom_call.1} parent=47 // pred_region
          %303 = dma.done [#allocation6], 4096
        $region56: #{tpu_custom_call.1} parent=47 // pred_fallthru
          _
        // Predicated region
        $region57: #{tpu_custom_call.1} parent=47 // pred_check
          %p304 = pneg %p110
        $region58: #{tpu_custom_call.1} parent=47 // pred_check_branch
          %306 = sbr.rel (%p304) target = $region60
        $region59: #{tpu_custom_call.1} parent=47 // pred_region
          %307 = dma.done [#allocation6], 8192
        $region60: #{tpu_custom_call.1} parent=47 // pred_fallthru
          _
        // Predicated region
        $region61: #{tpu_custom_call.1} parent=47 // pred_check
          %p308 = pneg %p152
        $region62: #{tpu_custom_call.1} parent=47 // pred_check_branch
          %310 = sbr.rel (%p308) target = $region64
        $region63: #{tpu_custom_call.1} parent=47 // pred_region
          %311 = dma.done [#allocation9], 2048
        $region64: #{tpu_custom_call.1} parent=47 // pred_fallthru
          _
        %s312 = sand.u32 %s34, 1
        %s313 = scalar_lea.sflag [#allocation3], %s312
        %s314 = sand.u32 %s34, 1
        %s315 = smul.addr %s314, 4
        %s316 = scalar_lea.vmem [#allocation2], %s315
        %p317 = pneg %p47
        %p318 = pneg %p44
        %p319 = pneg %p68
        %p320 = pneg %p65
        %p321 = pneg %p89
        %p322 = pneg %p86
        %p323 = pneg %p110
        %p324 = pneg %p107
        %p325 = pneg %p131
        %p326 = pneg %p128
        %p327 = pneg %p152
        %p328 = pneg %p149
        %p329 = pneg %p173
        %p330 = pneg %p170
        %p331 = pneg %p199
        %p332 = pneg %p196
        %s333 = sand.u32 %s186, 1
        %s334 = scalar_lea.sflag [#allocation4], %s333
        %s335 = sand.u32 %s186, 1
        %s336 = smul.addr %s335, 4
        %s337 = scalar_lea.vmem [#allocation10], %s336
        %v339 = vld [vmem:[%s295] sm:$0xf]
        %v340 = vld [vmem:[#allocation5] sm:$0xff]
        %v341 = vld [vmem:[#allocation5 + $0x8] sm:$0xff]
        %v342 = vld [vmem:[#allocation5 + $0x10] sm:$0xff]
        %v343 = vld [vmem:[#allocation5 + $0x18] sm:$0xff]
        %v344 = vld [vmem:[#allocation5 + $0x20] sm:$0xff]
        %v345 = vld [vmem:[#allocation5 + $0x28] sm:$0xff]
        %v346 = vld [vmem:[#allocation5 + $0x30] sm:$0xff]
        %v347 = vld [vmem:[#allocation5 + $0x38] sm:$0xff]
        %v348 = vld [vmem:[#allocation5 + $0x40] sm:$0xff]
        %v349 = vld [vmem:[#allocation5 + $0x48] sm:$0xff]
        %v350 = vld [vmem:[#allocation5 + $0x50] sm:$0xff]
        %v351 = vld [vmem:[#allocation5 + $0x58] sm:$0xff]
        %v352 = vld [vmem:[#allocation5 + $0x60] sm:$0xff]
        %v353 = vld [vmem:[#allocation5 + $0x68] sm:$0xff]
        %v354 = vld [vmem:[#allocation5 + $0x70] sm:$0xff]
        %v355 = vld [vmem:[#allocation5 + $0x78] sm:$0xff]
        %v356 = vld [vmem:[#allocation5 + $0x80] sm:$0xff]
        %v357 = vld [vmem:[#allocation5 + $0x88] sm:$0xff]
        %v358 = vld [vmem:[#allocation5 + $0x90] sm:$0xff]
        %v359 = vld [vmem:[#allocation5 + $0x98] sm:$0xff]
        %v360 = vld [vmem:[#allocation5 + $0xa0] sm:$0xff]
        %v361 = vld [vmem:[#allocation5 + $0xa8] sm:$0xff]
        %v362 = vld [vmem:[#allocation5 + $0xb0] sm:$0xff]
        %v363 = vld [vmem:[#allocation5 + $0xb8] sm:$0xff]
        %v364 = vld [vmem:[#allocation5 + $0xc0] sm:$0xff]
        %v365 = vld [vmem:[#allocation5 + $0xc8] sm:$0xff]
        %v366 = vld [vmem:[#allocation5 + $0xd0] sm:$0xff]
        %v367 = vld [vmem:[#allocation5 + $0xd8] sm:$0xff]
        %v368 = vld [vmem:[#allocation5 + $0xe0] sm:$0xff]
        %v369 = vld [vmem:[#allocation5 + $0xe8] sm:$0xff]
        %v370 = vld [vmem:[#allocation5 + $0xf0] sm:$0xff]
        %v371 = vld [vmem:[#allocation5 + $0xf8] sm:$0xff]
        %v372 = vld [vmem:[%s2] sm:$0xf]
        %v374 = vlaneseq
        %v375 = vshrl.u32 %v374, 7
        %v376 = vsub.s32 0, %v375
        %v377 = vrot.slane %v372, %v376
        %v378 = vlaneseq
        %v379 = vshrl.u32 %v378, 7
        %v380 = vsub.s32 1, %v379
        %v381 = vrot.slane %v372, %v380
        %v382 = vlaneseq
        %v383 = vshrl.u32 %v382, 7
        %v384 = vsub.s32 2, %v383
        %v385 = vrot.slane %v372, %v384
        %v386 = vlaneseq
        %v387 = vshrl.u32 %v386, 7
        %v388 = vsub.s32 3, %v387
        %v389 = vrot.slane %v372, %v388
        %v426 = vunpack.c.l.b16 %v340
        %v427 = vunpack.c.h.b16 %v340
        %v428 = vunpack.c.l.b16 %v341
        %v429 = vunpack.c.h.b16 %v341
        %v430 = vunpack.c.l.b16 %v342
        %v431 = vunpack.c.h.b16 %v342
        %v432 = vunpack.c.l.b16 %v343
        %v433 = vunpack.c.h.b16 %v343
        %v434 = vunpack.c.l.b16 %v344
        %v435 = vunpack.c.h.b16 %v344
        %v436 = vunpack.c.l.b16 %v345
        %v437 = vunpack.c.h.b16 %v345
        %v438 = vunpack.c.l.b16 %v346
        %v439 = vunpack.c.h.b16 %v346
        %v440 = vunpack.c.l.b16 %v347
        %v441 = vunpack.c.h.b16 %v347
        %v442 = vunpack.c.l.b16 %v348
        %v443 = vunpack.c.h.b16 %v348
        %v444 = vunpack.c.l.b16 %v349
        %v445 = vunpack.c.h.b16 %v349
        %v446 = vunpack.c.l.b16 %v350
        %v447 = vunpack.c.h.b16 %v350
        %v448 = vunpack.c.l.b16 %v351
        %v449 = vunpack.c.h.b16 %v351
        %v450 = vunpack.c.l.b16 %v352
        %v451 = vunpack.c.h.b16 %v352
        %v452 = vunpack.c.l.b16 %v353
        %v453 = vunpack.c.h.b16 %v353
        %v454 = vunpack.c.l.b16 %v354
        %v455 = vunpack.c.h.b16 %v354
        %v456 = vunpack.c.l.b16 %v355
        %v457 = vunpack.c.h.b16 %v355
        %v458 = vunpack.c.l.b16 %v356
        %v459 = vunpack.c.h.b16 %v356
        %v460 = vunpack.c.l.b16 %v357
        %v461 = vunpack.c.h.b16 %v357
        %v462 = vunpack.c.l.b16 %v358
        %v463 = vunpack.c.h.b16 %v358
        %v464 = vunpack.c.l.b16 %v359
        %v465 = vunpack.c.h.b16 %v359
        %v466 = vunpack.c.l.b16 %v360
        %v467 = vunpack.c.h.b16 %v360
        %v468 = vunpack.c.l.b16 %v361
        %v469 = vunpack.c.h.b16 %v361
        %v470 = vunpack.c.l.b16 %v362
        %v471 = vunpack.c.h.b16 %v362
        %v472 = vunpack.c.l.b16 %v363
        %v473 = vunpack.c.h.b16 %v363
        %v474 = vunpack.c.l.b16 %v364
        %v475 = vunpack.c.h.b16 %v364
        %v476 = vunpack.c.l.b16 %v365
        %v477 = vunpack.c.h.b16 %v365
        %v478 = vunpack.c.l.b16 %v366
        %v479 = vunpack.c.h.b16 %v366
        %v480 = vunpack.c.l.b16 %v367
        %v481 = vunpack.c.h.b16 %v367
        %v482 = vunpack.c.l.b16 %v368
        %v483 = vunpack.c.h.b16 %v368
        %v484 = vunpack.c.l.b16 %v369
        %v485 = vunpack.c.h.b16 %v369
        %v486 = vunpack.c.l.b16 %v370
        %v487 = vunpack.c.h.b16 %v370
        %v488 = vunpack.c.l.b16 %v371
        %v489 = vunpack.c.h.b16 %v371
        %v490 = vpack.c.b16 %v430, %v426
        %v491 = vpack.c.b16 %v431, %v427
        %v492 = vpack.c.b16 %v432, %v428
        %v493 = vpack.c.b16 %v433, %v429
        %v494 = vpack.c.b16 %v438, %v434
        %v495 = vpack.c.b16 %v439, %v435
        %v496 = vpack.c.b16 %v440, %v436
        %v497 = vpack.c.b16 %v441, %v437
        %v498 = vpack.c.b16 %v446, %v442
        %v499 = vpack.c.b16 %v447, %v443
        %v500 = vpack.c.b16 %v448, %v444
        %v501 = vpack.c.b16 %v449, %v445
        %v502 = vpack.c.b16 %v454, %v450
        %v503 = vpack.c.b16 %v455, %v451
        %v504 = vpack.c.b16 %v456, %v452
        %v505 = vpack.c.b16 %v457, %v453
        %v506 = vpack.c.b16 %v462, %v458
        %v507 = vpack.c.b16 %v463, %v459
        %v508 = vpack.c.b16 %v464, %v460
        %v509 = vpack.c.b16 %v465, %v461
        %v510 = vpack.c.b16 %v470, %v466
        %v511 = vpack.c.b16 %v471, %v467
        %v512 = vpack.c.b16 %v472, %v468
        %v513 = vpack.c.b16 %v473, %v469
        %v514 = vpack.c.b16 %v478, %v474
        %v515 = vpack.c.b16 %v479, %v475
        %v516 = vpack.c.b16 %v480, %v476
        %v517 = vpack.c.b16 %v481, %v477
        %v518 = vpack.c.b16 %v486, %v482
        %v519 = vpack.c.b16 %v487, %v483
        %v520 = vpack.c.b16 %v488, %v484
        %v521 = vpack.c.b16 %v489, %v485
        %554 = vmatprep.subr.bf16.mxu0 %v491
        %555 = vmatpush1.bf16.msra.mxu0 %v490
        %556 = vmatprep.subr.bf16.mxu0 %v495
        %557 = vmatpush1.bf16.msra.mxu0 %v494
        %558 = vmatprep.subr.bf16.mxu0 %v499
        %559 = vmatpush1.bf16.msra.mxu0 %v498
        %560 = vmatprep.subr.bf16.mxu0 %v503
        %561 = vmatpush1.bf16.msra.mxu0 %v502
        %562 = vmatprep.subr.bf16.mxu0 %v507
        %563 = vmatpush1.bf16.msra.mxu0 %v506
        %564 = vmatprep.subr.bf16.mxu0 %v511
        %565 = vmatpush1.bf16.msra.mxu0 %v510
        %566 = vmatprep.subr.bf16.mxu0 %v515
        %567 = vmatpush1.bf16.msra.mxu0 %v514
        %568 = vmatprep.subr.bf16.mxu0 %v519
        %569 = vmatpush1.bf16.msra.mxu0 %v518
        %570 = vmatprep.subr.bf16.mxu0 0
        %571 = vmatpush1.bf16.msra.mxu0 0
        %572 = vmatprep.subr.bf16.mxu0 0
        %573 = vmatpush1.bf16.msra.mxu0 0
        %574 = vmatprep.subr.bf16.mxu0 0
        %575 = vmatpush1.bf16.msra.mxu0 0
        %576 = vmatprep.subr.bf16.mxu0 0
        %577 = vmatpush1.bf16.msra.mxu0 0
        %578 = vmatprep.subr.bf16.mxu0 0
        %579 = vmatpush1.bf16.msra.mxu0 0
        %580 = vmatprep.subr.bf16.mxu0 0
        %581 = vmatpush1.bf16.msra.mxu0 0
        %582 = vmatprep.subr.bf16.mxu0 0
        %583 = vmatpush1.bf16.msra.mxu0 0
        %584 = vmatprep.subr.bf16.mxu0 0
        %585 = vmatpush1.bf16.msra.mxu0 0
        %586 = vmatprep.mubr.bf16.mxu0 0
        %587 = vmatmul.mubr.bf16.gmra.mrb[0].mxu0 %v339
        %v588 = vpop.f32.mrb[0].mxu0
        %v589 = vadd.f32 %v377, %v588
        %v590 = vpop.f32.mrb[0].mxu0
        %v591 = vadd.f32 %v381, %v590
        %v592 = vpop.f32.mrb[0].mxu0
        %v593 = vpop.f32.mrb[0].mxu0
        %594 = vdwg.mxu0
        %595 = vmatprep.subr.bf16.mxu0 %v493
        %596 = vmatpush1.bf16.msra.mxu0 %v492
        %597 = vmatprep.subr.bf16.mxu0 %v497
        %598 = vmatpush1.bf16.msra.mxu0 %v496
        %599 = vmatprep.subr.bf16.mxu0 %v501
        %600 = vmatpush1.bf16.msra.mxu0 %v500
        %601 = vmatprep.subr.bf16.mxu0 %v505
        %602 = vmatpush1.bf16.msra.mxu0 %v504
        %603 = vmatprep.subr.bf16.mxu0 %v509
        %604 = vmatpush1.bf16.msra.mxu0 %v508
        %605 = vmatprep.subr.bf16.mxu0 %v513
        %606 = vmatpush1.bf16.msra.mxu0 %v512
        %607 = vmatprep.subr.bf16.mxu0 %v517
        %608 = vmatpush1.bf16.msra.mxu0 %v516
        %609 = vmatprep.subr.bf16.mxu0 %v521
        %610 = vmatpush1.bf16.msra.mxu0 %v520
        %611 = vmatprep.subr.bf16.mxu0 0
        %612 = vmatpush1.bf16.msra.mxu0 0
        %613 = vmatprep.subr.bf16.mxu0 0
        %614 = vmatpush1.bf16.msra.mxu0 0
        %615 = vmatprep.subr.bf16.mxu0 0
        %616 = vmatpush1.bf16.msra.mxu0 0
        %617 = vmatprep.subr.bf16.mxu0 0
        %618 = vmatpush1.bf16.msra.mxu0 0
        %619 = vmatprep.subr.bf16.mxu0 0
        %620 = vmatpush1.bf16.msra.mxu0 0
        %621 = vmatprep.subr.bf16.mxu0 0
        %622 = vmatpush1.bf16.msra.mxu0 0
        %623 = vmatprep.subr.bf16.mxu0 0
        %624 = vmatpush1.bf16.msra.mxu0 0
        %625 = vmatprep.subr.bf16.mxu0 0
        %626 = vmatpush1.bf16.msra.mxu0 0
        %627 = vmatprep.mubr.bf16.mxu0 0
        %628 = vmatmul.mubr.bf16.gmra.mrb[0].mxu0 %v339
        %v629 = vpop.f32.mrb[0].mxu0
        %v630 = vadd.f32 %v385, %v629
        %v631 = vpop.f32.mrb[0].mxu0
        %v632 = vadd.f32 %v389, %v631
        %v633 = vpop.f32.mrb[0].mxu0
        %v634 = vpop.f32.mrb[0].mxu0
        %635 = vdwg.mxu0
        %v636 = vmax.f32 %v589, 0.0
        %v637 = vmax.f32 %v591, 0.0
        %v638 = vmax.f32 %v630, 0.0
        %v639 = vmax.f32 %v632, 0.0
        %v640 = vpack.c.bf16 %v636, %v636
        %v641 = vpack.c.bf16 %v637, %v637
        %v642 = vpack.c.bf16 %v638, %v638
        %v643 = vpack.c.bf16 %v639, %v639
        %v644 = vld [vmem:[#allocation7] sm:$0xff]
        %v645 = vld [vmem:[#allocation7 + $0x8] sm:$0xff]
        %v646 = vld [vmem:[#allocation7 + $0x10] sm:$0xff]
        %v647 = vld [vmem:[#allocation7 + $0x18] sm:$0xff]
        %v648 = vld [vmem:[#allocation7 + $0x20] sm:$0xff]
        %v649 = vld [vmem:[#allocation7 + $0x28] sm:$0xff]
        %v650 = vld [vmem:[#allocation7 + $0x30] sm:$0xff]
        %v651 = vld [vmem:[#allocation7 + $0x38] sm:$0xff]
        %v652 = vld [vmem:[#allocation7 + $0x40] sm:$0xff]
        %v653 = vld [vmem:[#allocation7 + $0x48] sm:$0xff]
        %v654 = vld [vmem:[#allocation7 + $0x50] sm:$0xff]
        %v655 = vld [vmem:[#allocation7 + $0x58] sm:$0xff]
        %v656 = vld [vmem:[#allocation7 + $0x60] sm:$0xff]
        %v657 = vld [vmem:[#allocation7 + $0x68] sm:$0xff]
        %v658 = vld [vmem:[#allocation7 + $0x70] sm:$0xff]
        %v659 = vld [vmem:[#allocation7 + $0x78] sm:$0xff]
        %v660 = vld [vmem:[#allocation7 + $0x80] sm:$0xff]
        %v661 = vld [vmem:[#allocation7 + $0x88] sm:$0xff]
        %v662 = vld [vmem:[#allocation7 + $0x90] sm:$0xff]
        %v663 = vld [vmem:[#allocation7 + $0x98] sm:$0xff]
        %v664 = vld [vmem:[#allocation7 + $0xa0] sm:$0xff]
        %v665 = vld [vmem:[#allocation7 + $0xa8] sm:$0xff]
        %v666 = vld [vmem:[#allocation7 + $0xb0] sm:$0xff]
        %v667 = vld [vmem:[#allocation7 + $0xb8] sm:$0xff]
        %v668 = vld [vmem:[#allocation7 + $0xc0] sm:$0xff]
        %v669 = vld [vmem:[#allocation7 + $0xc8] sm:$0xff]
        %v670 = vld [vmem:[#allocation7 + $0xd0] sm:$0xff]
        %v671 = vld [vmem:[#allocation7 + $0xd8] sm:$0xff]
        %v672 = vld [vmem:[#allocation7 + $0xe0] sm:$0xff]
        %v673 = vld [vmem:[#allocation7 + $0xe8] sm:$0xff]
        %v674 = vld [vmem:[#allocation7 + $0xf0] sm:$0xff]
        %v675 = vld [vmem:[#allocation7 + $0xf8] sm:$0xff]
        %v676 = vld [vmem:[#allocation7 + $0x100] sm:$0xff]
        %v677 = vld [vmem:[#allocation7 + $0x108] sm:$0xff]
        %v678 = vld [vmem:[#allocation7 + $0x110] sm:$0xff]
        %v679 = vld [vmem:[#allocation7 + $0x118] sm:$0xff]
        %v680 = vld [vmem:[#allocation7 + $0x120] sm:$0xff]
        %v681 = vld [vmem:[#allocation7 + $0x128] sm:$0xff]
        %v682 = vld [vmem:[#allocation7 + $0x130] sm:$0xff]
        %v683 = vld [vmem:[#allocation7 + $0x138] sm:$0xff]
        %v684 = vld [vmem:[#allocation7 + $0x140] sm:$0xff]
        %v685 = vld [vmem:[#allocation7 + $0x148] sm:$0xff]
        %v686 = vld [vmem:[#allocation7 + $0x150] sm:$0xff]
        %v687 = vld [vmem:[#allocation7 + $0x158] sm:$0xff]
        %v688 = vld [vmem:[#allocation7 + $0x160] sm:$0xff]
        %v689 = vld [vmem:[#allocation7 + $0x168] sm:$0xff]
        %v690 = vld [vmem:[#allocation7 + $0x170] sm:$0xff]
        %v691 = vld [vmem:[#allocation7 + $0x178] sm:$0xff]
        %v692 = vld [vmem:[#allocation7 + $0x180] sm:$0xff]
        %v693 = vld [vmem:[#allocation7 + $0x188] sm:$0xff]
        %v694 = vld [vmem:[#allocation7 + $0x190] sm:$0xff]
        %v695 = vld [vmem:[#allocation7 + $0x198] sm:$0xff]
        %v696 = vld [vmem:[#allocation7 + $0x1a0] sm:$0xff]
        %v697 = vld [vmem:[#allocation7 + $0x1a8] sm:$0xff]
        %v698 = vld [vmem:[#allocation7 + $0x1b0] sm:$0xff]
        %v699 = vld [vmem:[#allocation7 + $0x1b8] sm:$0xff]
        %v700 = vld [vmem:[#allocation7 + $0x1c0] sm:$0xff]
        %v701 = vld [vmem:[#allocation7 + $0x1c8] sm:$0xff]
        %v702 = vld [vmem:[#allocation7 + $0x1d0] sm:$0xff]
        %v703 = vld [vmem:[#allocation7 + $0x1d8] sm:$0xff]
        %v704 = vld [vmem:[#allocation7 + $0x1e0] sm:$0xff]
        %v705 = vld [vmem:[#allocation7 + $0x1e8] sm:$0xff]
        %v706 = vld [vmem:[#allocation7 + $0x1f0] sm:$0xff]
        %v707 = vld [vmem:[#allocation7 + $0x1f8] sm:$0xff]
        %v708 = vld [vmem:[%s4] sm:$0x3]
        %v710 = vlaneseq
        %v711 = vshrl.u32 %v710, 7
        %v712 = vsub.s32 0, %v711
        %v713 = vrot.slane %v708, %v712
        %v714 = vlaneseq
        %v715 = vshrl.u32 %v714, 7
        %v716 = vsub.s32 1, %v715
        %v717 = vrot.slane %v708, %v716
        %v784 = vunpack.c.l.b16 %v644
        %v785 = vunpack.c.h.b16 %v644
        %v786 = vunpack.c.l.b16 %v645
        %v787 = vunpack.c.h.b16 %v645
        %v788 = vunpack.c.l.b16 %v646
        %v789 = vunpack.c.h.b16 %v646
        %v790 = vunpack.c.l.b16 %v647
        %v791 = vunpack.c.h.b16 %v647
        %v792 = vunpack.c.l.b16 %v648
        %v793 = vunpack.c.h.b16 %v648
        %v794 = vunpack.c.l.b16 %v649
        %v795 = vunpack.c.h.b16 %v649
        %v796 = vunpack.c.l.b16 %v650
        %v797 = vunpack.c.h.b16 %v650
        %v798 = vunpack.c.l.b16 %v651
        %v799 = vunpack.c.h.b16 %v651
        %v800 = vunpack.c.l.b16 %v652
        %v801 = vunpack.c.h.b16 %v652
        %v802 = vunpack.c.l.b16 %v653
        %v803 = vunpack.c.h.b16 %v653
        %v804 = vunpack.c.l.b16 %v654
        %v805 = vunpack.c.h.b16 %v654
        %v806 = vunpack.c.l.b16 %v655
        %v807 = vunpack.c.h.b16 %v655
        %v808 = vunpack.c.l.b16 %v656
        %v809 = vunpack.c.h.b16 %v656
        %v810 = vunpack.c.l.b16 %v657
        %v811 = vunpack.c.h.b16 %v657
        %v812 = vunpack.c.l.b16 %v658
        %v813 = vunpack.c.h.b16 %v658
        %v814 = vunpack.c.l.b16 %v659
        %v815 = vunpack.c.h.b16 %v659
        %v816 = vunpack.c.l.b16 %v660
        %v817 = vunpack.c.h.b16 %v660
        %v818 = vunpack.c.l.b16 %v661
        %v819 = vunpack.c.h.b16 %v661
        %v820 = vunpack.c.l.b16 %v662
        %v821 = vunpack.c.h.b16 %v662
        %v822 = vunpack.c.l.b16 %v663
        %v823 = vunpack.c.h.b16 %v663
        %v824 = vunpack.c.l.b16 %v664
        %v825 = vunpack.c.h.b16 %v664
        %v826 = vunpack.c.l.b16 %v665
        %v827 = vunpack.c.h.b16 %v665
        %v828 = vunpack.c.l.b16 %v666
        %v829 = vunpack.c.h.b16 %v666
        %v830 = vunpack.c.l.b16 %v667
        %v831 = vunpack.c.h.b16 %v667
        %v832 = vunpack.c.l.b16 %v668
        %v833 = vunpack.c.h.b16 %v668
        %v834 = vunpack.c.l.b16 %v669
        %v835 = vunpack.c.h.b16 %v669
        %v836 = vunpack.c.l.b16 %v670
        %v837 = vunpack.c.h.b16 %v670
        %v838 = vunpack.c.l.b16 %v671
        %v839 = vunpack.c.h.b16 %v671
        %v840 = vunpack.c.l.b16 %v672
        %v841 = vunpack.c.h.b16 %v672
        %v842 = vunpack.c.l.b16 %v673
        %v843 = vunpack.c.h.b16 %v673
        %v844 = vunpack.c.l.b16 %v674
        %v845 = vunpack.c.h.b16 %v674
        %v846 = vunpack.c.l.b16 %v675
        %v847 = vunpack.c.h.b16 %v675
        %v848 = vunpack.c.l.b16 %v676
        %v849 = vunpack.c.h.b16 %v676
        %v850 = vunpack.c.l.b16 %v677
        %v851 = vunpack.c.h.b16 %v677
        %v852 = vunpack.c.l.b16 %v678
        %v853 = vunpack.c.h.b16 %v678
        %v854 = vunpack.c.l.b16 %v679
        %v855 = vunpack.c.h.b16 %v679
        %v856 = vunpack.c.l.b16 %v680
        %v857 = vunpack.c.h.b16 %v680
        %v858 = vunpack.c.l.b16 %v681
        %v859 = vunpack.c.h.b16 %v681
        %v860 = vunpack.c.l.b16 %v682
        %v861 = vunpack.c.h.b16 %v682
        %v862 = vunpack.c.l.b16 %v683
        %v863 = vunpack.c.h.b16 %v683
        %v864 = vunpack.c.l.b16 %v684
        %v865 = vunpack.c.h.b16 %v684
        %v866 = vunpack.c.l.b16 %v685
        %v867 = vunpack.c.h.b16 %v685
        %v868 = vunpack.c.l.b16 %v686
        %v869 = vunpack.c.h.b16 %v686
        %v870 = vunpack.c.l.b16 %v687
        %v871 = vunpack.c.h.b16 %v687
        %v872 = vunpack.c.l.b16 %v688
        %v873 = vunpack.c.h.b16 %v688
        %v874 = vunpack.c.l.b16 %v689
        %v875 = vunpack.c.h.b16 %v689
        %v876 = vunpack.c.l.b16 %v690
        %v877 = vunpack.c.h.b16 %v690
        %v878 = vunpack.c.l.b16 %v691
        %v879 = vunpack.c.h.b16 %v691
        %v880 = vunpack.c.l.b16 %v692
        %v881 = vunpack.c.h.b16 %v692
        %v882 = vunpack.c.l.b16 %v693
        %v883 = vunpack.c.h.b16 %v693
        %v884 = vunpack.c.l.b16 %v694
        %v885 = vunpack.c.h.b16 %v694
        %v886 = vunpack.c.l.b16 %v695
        %v887 = vunpack.c.h.b16 %v695
        %v888 = vunpack.c.l.b16 %v696
        %v889 = vunpack.c.h.b16 %v696
        %v890 = vunpack.c.l.b16 %v697
        %v891 = vunpack.c.h.b16 %v697
        %v892 = vunpack.c.l.b16 %v698
        %v893 = vunpack.c.h.b16 %v698
        %v894 = vunpack.c.l.b16 %v699
        %v895 = vunpack.c.h.b16 %v699
        %v896 = vunpack.c.l.b16 %v700
        %v897 = vunpack.c.h.b16 %v700
        %v898 = vunpack.c.l.b16 %v701
        %v899 = vunpack.c.h.b16 %v701
        %v900 = vunpack.c.l.b16 %v702
        %v901 = vunpack.c.h.b16 %v702
        %v902 = vunpack.c.l.b16 %v703
        %v903 = vunpack.c.h.b16 %v703
        %v904 = vunpack.c.l.b16 %v704
        %v905 = vunpack.c.h.b16 %v704
        %v906 = vunpack.c.l.b16 %v705
        %v907 = vunpack.c.h.b16 %v705
        %v908 = vunpack.c.l.b16 %v706
        %v909 = vunpack.c.h.b16 %v706
        %v910 = vunpack.c.l.b16 %v707
        %v911 = vunpack.c.h.b16 %v707
        %v912 = vpack.c.b16 %v786, %v784
        %v913 = vpack.c.b16 %v787, %v785
        %v914 = vpack.c.b16 %v790, %v788
        %v915 = vpack.c.b16 %v791, %v789
        %v916 = vpack.c.b16 %v794, %v792
        %v917 = vpack.c.b16 %v795, %v793
        %v918 = vpack.c.b16 %v798, %v796
        %v919 = vpack.c.b16 %v799, %v797
        %v920 = vpack.c.b16 %v802, %v800
        %v921 = vpack.c.b16 %v803, %v801
        %v922 = vpack.c.b16 %v806, %v804
        %v923 = vpack.c.b16 %v807, %v805
        %v924 = vpack.c.b16 %v810, %v808
        %v925 = vpack.c.b16 %v811, %v809
        %v926 = vpack.c.b16 %v814, %v812
        %v927 = vpack.c.b16 %v815, %v813
        %v928 = vpack.c.b16 %v818, %v816
        %v929 = vpack.c.b16 %v819, %v817
        %v930 = vpack.c.b16 %v822, %v820
        %v931 = vpack.c.b16 %v823, %v821
        %v932 = vpack.c.b16 %v826, %v824
        %v933 = vpack.c.b16 %v827, %v825
        %v934 = vpack.c.b16 %v830, %v828
        %v935 = vpack.c.b16 %v831, %v829
        %v936 = vpack.c.b16 %v834, %v832
        %v937 = vpack.c.b16 %v835, %v833
        %v938 = vpack.c.b16 %v838, %v836
        %v939 = vpack.c.b16 %v839, %v837
        %v940 = vpack.c.b16 %v842, %v840
        %v941 = vpack.c.b16 %v843, %v841
        %v942 = vpack.c.b16 %v846, %v844
        %v943 = vpack.c.b16 %v847, %v845
        %v944 = vpack.c.b16 %v850, %v848
        %v945 = vpack.c.b16 %v851, %v849
        %v946 = vpack.c.b16 %v854, %v852
        %v947 = vpack.c.b16 %v855, %v853
        %v948 = vpack.c.b16 %v858, %v856
        %v949 = vpack.c.b16 %v859, %v857
        %v950 = vpack.c.b16 %v862, %v860
        %v951 = vpack.c.b16 %v863, %v861
        %v952 = vpack.c.b16 %v866, %v864
        %v953 = vpack.c.b16 %v867, %v865
        %v954 = vpack.c.b16 %v870, %v868
        %v955 = vpack.c.b16 %v871, %v869
        %v956 = vpack.c.b16 %v874, %v872
        %v957 = vpack.c.b16 %v875, %v873
        %v958 = vpack.c.b16 %v878, %v876
        %v959 = vpack.c.b16 %v879, %v877
        %v960 = vpack.c.b16 %v882, %v880
        %v961 = vpack.c.b16 %v883, %v881
        %v962 = vpack.c.b16 %v886, %v884
        %v963 = vpack.c.b16 %v887, %v885
        %v964 = vpack.c.b16 %v890, %v888
        %v965 = vpack.c.b16 %v891, %v889
        %v966 = vpack.c.b16 %v894, %v892
        %v967 = vpack.c.b16 %v895, %v893
        %v968 = vpack.c.b16 %v898, %v896
        %v969 = vpack.c.b16 %v899, %v897
        %v970 = vpack.c.b16 %v902, %v900
        %v971 = vpack.c.b16 %v903, %v901
        %v972 = vpack.c.b16 %v906, %v904
        %v973 = vpack.c.b16 %v907, %v905
        %v974 = vpack.c.b16 %v910, %v908
        %v975 = vpack.c.b16 %v911, %v909
        %1040 = vmatprep.subr.bf16.mxu0 %v913
        %1041 = vmatpush1.bf16.msra.mxu0 %v912
        %1042 = vmatprep.subr.bf16.mxu0 %v915
        %1043 = vmatpush1.bf16.msra.mxu0 %v914
        %1044 = vmatprep.subr.bf16.mxu0 %v917
        %1045 = vmatpush1.bf16.msra.mxu0 %v916
        %1046 = vmatprep.subr.bf16.mxu0 %v919
        %1047 = vmatpush1.bf16.msra.mxu0 %v918
        %1048 = vmatprep.subr.bf16.mxu0 %v921
        %1049 = vmatpush1.bf16.msra.mxu0 %v920
        %1050 = vmatprep.subr.bf16.mxu0 %v923
        %1051 = vmatpush1.bf16.msra.mxu0 %v922
        %1052 = vmatprep.subr.bf16.mxu0 %v925
        %1053 = vmatpush1.bf16.msra.mxu0 %v924
        %1054 = vmatprep.subr.bf16.mxu0 %v927
        %1055 = vmatpush1.bf16.msra.mxu0 %v926
        %1056 = vmatprep.subr.bf16.mxu0 %v929
        %1057 = vmatpush1.bf16.msra.mxu0 %v928
        %1058 = vmatprep.subr.bf16.mxu0 %v931
        %1059 = vmatpush1.bf16.msra.mxu0 %v930
        %1060 = vmatprep.subr.bf16.mxu0 %v933
        %1061 = vmatpush1.bf16.msra.mxu0 %v932
        %1062 = vmatprep.subr.bf16.mxu0 %v935
        %1063 = vmatpush1.bf16.msra.mxu0 %v934
        %1064 = vmatprep.subr.bf16.mxu0 %v937
        %1065 = vmatpush1.bf16.msra.mxu0 %v936
        %1066 = vmatprep.subr.bf16.mxu0 %v939
        %1067 = vmatpush1.bf16.msra.mxu0 %v938
        %1068 = vmatprep.subr.bf16.mxu0 %v941
        %1069 = vmatpush1.bf16.msra.mxu0 %v940
        %1070 = vmatprep.subr.bf16.mxu0 %v943
        %1071 = vmatpush1.bf16.msra.mxu0 %v942
        %1072 = vmatprep.mubr.bf16.mxu0 %v641
        %1073 = vmatmul.mubr.bf16.gmra.mrb[0].mxu0 %v640
        %v1074 = vpop.f32.mrb[0].mxu0
        %v1075 = vadd.f32 %v713, %v1074
        %v1076 = vpop.f32.mrb[0].mxu0
        %v1077 = vadd.f32 %v717, %v1076
        %v1078 = vpop.f32.mrb[0].mxu0
        %v1079 = vpop.f32.mrb[0].mxu0
        %1080 = vdwg.mxu0
        %1081 = vmatprep.subr.bf16.mxu0 %v945
        %1082 = vmatpush1.bf16.msra.mxu0 %v944
        %1083 = vmatprep.subr.bf16.mxu0 %v947
        %1084 = vmatpush1.bf16.msra.mxu0 %v946
        %1085 = vmatprep.subr.bf16.mxu0 %v949
        %1086 = vmatpush1.bf16.msra.mxu0 %v948
        %1087 = vmatprep.subr.bf16.mxu0 %v951
        %1088 = vmatpush1.bf16.msra.mxu0 %v950
        %1089 = vmatprep.subr.bf16.mxu0 %v953
        %1090 = vmatpush1.bf16.msra.mxu0 %v952
        %1091 = vmatprep.subr.bf16.mxu0 %v955
        %1092 = vmatpush1.bf16.msra.mxu0 %v954
        %1093 = vmatprep.subr.bf16.mxu0 %v957
        %1094 = vmatpush1.bf16.msra.mxu0 %v956
        %1095 = vmatprep.subr.bf16.mxu0 %v959
        %1096 = vmatpush1.bf16.msra.mxu0 %v958
        %1097 = vmatprep.subr.bf16.mxu0 %v961
        %1098 = vmatpush1.bf16.msra.mxu0 %v960
        %1099 = vmatprep.subr.bf16.mxu0 %v963
        %1100 = vmatpush1.bf16.msra.mxu0 %v962
        %1101 = vmatprep.subr.bf16.mxu0 %v965
        %1102 = vmatpush1.bf16.msra.mxu0 %v964
        %1103 = vmatprep.subr.bf16.mxu0 %v967
        %1104 = vmatpush1.bf16.msra.mxu0 %v966
        %1105 = vmatprep.subr.bf16.mxu0 %v969
        %1106 = vmatpush1.bf16.msra.mxu0 %v968
        %1107 = vmatprep.subr.bf16.mxu0 %v971
        %1108 = vmatpush1.bf16.msra.mxu0 %v970
        %1109 = vmatprep.subr.bf16.mxu0 %v973
        %1110 = vmatpush1.bf16.msra.mxu0 %v972
        %1111 = vmatprep.subr.bf16.mxu0 %v975
        %1112 = vmatpush1.bf16.msra.mxu0 %v974
        %1113 = vmatprep.mubr.bf16.mxu0 %v643
        %1114 = vmatmul.mubr.bf16.gmra.mrb[0].mxu0 %v642
        %v1115 = vpop.f32.mrb[0].mxu0
        %v1116 = vadd.f32 %v1075, %v1115
        %v1117 = vpop.f32.mrb[0].mxu0
        %v1118 = vadd.f32 %v1077, %v1117
        %v1119 = vpop.f32.mrb[0].mxu0
        %v1120 = vpop.f32.mrb[0].mxu0
        %1121 = vdwg.mxu0
        %v1122 = vmax.f32 %v1116, 0.0
        %v1123 = vmax.f32 %v1118, 0.0
        %v1124 = vpack.c.bf16 %v1122, %v1122
        %v1125 = vpack.c.bf16 %v1123, %v1123
        %v1126 = vld [vmem:[#allocation8] sm:$0xf]
        %v1127 = vld [vmem:[#allocation8 + $0x4] sm:$0xf]
        %v1128 = vld [vmem:[#allocation8 + $0x8] sm:$0xf]
        %v1129 = vld [vmem:[#allocation8 + $0xc] sm:$0xf]
        %v1130 = vld [vmem:[#allocation8 + $0x10] sm:$0xf]
        %v1131 = vld [vmem:[#allocation8 + $0x14] sm:$0xf]
        %v1132 = vld [vmem:[#allocation8 + $0x18] sm:$0xf]
        %v1133 = vld [vmem:[#allocation8 + $0x1c] sm:$0xf]
        %v1134 = vld [vmem:[#allocation8 + $0x20] sm:$0xf]
        %v1135 = vld [vmem:[#allocation8 + $0x24] sm:$0xf]
        %v1136 = vld [vmem:[#allocation8 + $0x28] sm:$0xf]
        %v1137 = vld [vmem:[#allocation8 + $0x2c] sm:$0xf]
        %v1138 = vld [vmem:[#allocation8 + $0x30] sm:$0xf]
        %v1139 = vld [vmem:[#allocation8 + $0x34] sm:$0xf]
        %v1140 = vld [vmem:[#allocation8 + $0x38] sm:$0xf]
        %v1141 = vld [vmem:[#allocation8 + $0x3c] sm:$0xf]
        %v1142 = vld [vmem:[#allocation8 + $0x40] sm:$0xf]
        %v1143 = vld [vmem:[#allocation8 + $0x44] sm:$0xf]
        %v1144 = vld [vmem:[#allocation8 + $0x48] sm:$0xf]
        %v1145 = vld [vmem:[#allocation8 + $0x4c] sm:$0xf]
        %v1146 = vld [vmem:[#allocation8 + $0x50] sm:$0xf]
        %v1147 = vld [vmem:[#allocation8 + $0x54] sm:$0xf]
        %v1148 = vld [vmem:[#allocation8 + $0x58] sm:$0xf]
        %v1149 = vld [vmem:[#allocation8 + $0x5c] sm:$0xf]
        %v1150 = vld [vmem:[#allocation8 + $0x60] sm:$0xf]
        %v1151 = vld [vmem:[#allocation8 + $0x64] sm:$0xf]
        %v1152 = vld [vmem:[#allocation8 + $0x68] sm:$0xf]
        %v1153 = vld [vmem:[#allocation8 + $0x6c] sm:$0xf]
        %v1154 = vld [vmem:[#allocation8 + $0x70] sm:$0xf]
        %v1155 = vld [vmem:[#allocation8 + $0x74] sm:$0xf]
        %v1156 = vld [vmem:[#allocation8 + $0x78] sm:$0xf]
        %v1157 = vld [vmem:[#allocation8 + $0x7c] sm:$0xf]
        %v1158 = vld [vmem:[%s6] sm:$0x1]
        %v1160 = vlaneseq
        %v1161 = vshrl.u32 %v1160, 7
        %v1162 = vsub.s32 0, %v1161
        %v1163 = vrot.slane %v1158, %v1162
        %v1197 = vunpack.c.l.b16 %v1126
        %v1198 = vunpack.c.l.b16 %v1127
        %v1199 = vunpack.c.l.b16 %v1128
        %v1200 = vunpack.c.l.b16 %v1129
        %v1201 = vunpack.c.l.b16 %v1130
        %v1202 = vunpack.c.l.b16 %v1131
        %v1203 = vunpack.c.l.b16 %v1132
        %v1204 = vunpack.c.l.b16 %v1133
        %v1205 = vunpack.c.l.b16 %v1134
        %v1206 = vunpack.c.l.b16 %v1135
        %v1207 = vunpack.c.l.b16 %v1136
        %v1208 = vunpack.c.l.b16 %v1137
        %v1209 = vunpack.c.l.b16 %v1138
        %v1210 = vunpack.c.l.b16 %v1139
        %v1211 = vunpack.c.l.b16 %v1140
        %v1212 = vunpack.c.l.b16 %v1141
        %v1213 = vunpack.c.l.b16 %v1142
        %v1214 = vunpack.c.l.b16 %v1143
        %v1215 = vunpack.c.l.b16 %v1144
        %v1216 = vunpack.c.l.b16 %v1145
        %v1217 = vunpack.c.l.b16 %v1146
        %v1218 = vunpack.c.l.b16 %v1147
        %v1219 = vunpack.c.l.b16 %v1148
        %v1220 = vunpack.c.l.b16 %v1149
        %v1221 = vunpack.c.l.b16 %v1150
        %v1222 = vunpack.c.l.b16 %v1151
        %v1223 = vunpack.c.l.b16 %v1152
        %v1224 = vunpack.c.l.b16 %v1153
        %v1225 = vunpack.c.l.b16 %v1154
        %v1226 = vunpack.c.l.b16 %v1155
        %v1227 = vunpack.c.l.b16 %v1156
        %v1228 = vunpack.c.l.b16 %v1157
        %v1229 = vpack.c.b16 %v1198, %v1197
        %v1230 = vpack.c.b16 %v1200, %v1199
        %v1231 = vpack.c.b16 %v1202, %v1201
        %v1232 = vpack.c.b16 %v1204, %v1203
        %v1233 = vpack.c.b16 %v1206, %v1205
        %v1234 = vpack.c.b16 %v1208, %v1207
        %v1235 = vpack.c.b16 %v1210, %v1209
        %v1236 = vpack.c.b16 %v1212, %v1211
        %v1237 = vpack.c.b16 %v1214, %v1213
        %v1238 = vpack.c.b16 %v1216, %v1215
        %v1239 = vpack.c.b16 %v1218, %v1217
        %v1240 = vpack.c.b16 %v1220, %v1219
        %v1241 = vpack.c.b16 %v1222, %v1221
        %v1242 = vpack.c.b16 %v1224, %v1223
        %v1243 = vpack.c.b16 %v1226, %v1225
        %v1244 = vpack.c.b16 %v1228, %v1227
        %1261 = vmatprep.subr.bf16.mxu0 0
        %1262 = vmatpush1.bf16.msra.mxu0 %v1229
        %1263 = vmatprep.subr.bf16.mxu0 0
        %1264 = vmatpush1.bf16.msra.mxu0 %v1230
        %1265 = vmatprep.subr.bf16.mxu0 0
        %1266 = vmatpush1.bf16.msra.mxu0 %v1231
        %1267 = vmatprep.subr.bf16.mxu0 0
        %1268 = vmatpush1.bf16.msra.mxu0 %v1232
        %1269 = vmatprep.subr.bf16.mxu0 0
        %1270 = vmatpush1.bf16.msra.mxu0 %v1233
        %1271 = vmatprep.subr.bf16.mxu0 0
        %1272 = vmatpush1.bf16.msra.mxu0 %v1234
        %1273 = vmatprep.subr.bf16.mxu0 0
        %1274 = vmatpush1.bf16.msra.mxu0 %v1235
        %1275 = vmatprep.subr.bf16.mxu0 0
        %1276 = vmatpush1.bf16.msra.mxu0 %v1236
        %1277 = vmatprep.subr.bf16.mxu0 0
        %1278 = vmatpush1.bf16.msra.mxu0 %v1237
        %1279 = vmatprep.subr.bf16.mxu0 0
        %1280 = vmatpush1.bf16.msra.mxu0 %v1238
        %1281 = vmatprep.subr.bf16.mxu0 0
        %1282 = vmatpush1.bf16.msra.mxu0 %v1239
        %1283 = vmatprep.subr.bf16.mxu0 0
        %1284 = vmatpush1.bf16.msra.mxu0 %v1240
        %1285 = vmatprep.subr.bf16.mxu0 0
        %1286 = vmatpush1.bf16.msra.mxu0 %v1241
        %1287 = vmatprep.subr.bf16.mxu0 0
        %1288 = vmatpush1.bf16.msra.mxu0 %v1242
        %1289 = vmatprep.subr.bf16.mxu0 0
        %1290 = vmatpush1.bf16.msra.mxu0 %v1243
        %1291 = vmatprep.subr.bf16.mxu0 0
        %1292 = vmatpush1.bf16.msra.mxu0 %v1244
        %1293 = vmatprep.mubr.bf16.mxu0 %v1125
        %1294 = vmatmul.mubr.bf16.gmra.mrb[0].mxu0 %v1124
        %v1295 = vpop.f32.mrb[0].mxu0
        %v1296 = vadd.f32 %v1163, %v1295
        %v1297 = vpop.f32.mrb[0].mxu0
        %v1298 = vpop.f32.mrb[0].mxu0
        %v1299 = vpop.f32.mrb[0].mxu0
        %1300 = vdwg.mxu0
        %v1301 = vpack.c.bf16 %v1296, %v1296
        %1302 = vst [vmem:[%s337] sm:$0xf] %v1301
        %s1303 = sand.u32 %s186, 1
        %s1304 = scalar_lea.sflag [#allocation4], %s1303
        %s1305 = sand.u32 %s186, 1
        %s1306 = smul.addr %s1305, 4
        %s1307 = scalar_lea.vmem [#allocation10], %s1306
        // Predicated region
        $region65: #{tpu_custom_call.1} parent=47 // pred_check
          %p1308 = pneg %p196
        $region66: #{tpu_custom_call.1} parent=47 // pred_check_branch
          %1310 = sbr.rel (%p1308) target = $region68
        $region67: #{tpu_custom_call.1} parent=47 // pred_region
          %s1312 = ssub.s32 64, 64
          %1313 = vsyncadd %s1304, %s1312
          %s1314 = smul.addr %s26, 64
          %s1315 = scalar_lea.hbm %s7, %s1314
          %s1317 = sshll.u32 %s1307, 4
          %s1318 = int_to_ptr.vmem [resolvable:$true] %s1317
          %1320 = dma.vmem_to_hbm [thread:$0]  %s1318, 64, %s1315, %s1304
        $region68: #{tpu_custom_call.1} parent=47 // pred_fallthru
          _
      $region48: #{tpu_custom_call.1} parent=5 // pred_fallthru
        _
      %p1321 = scmp.le.s32.totalorder 2, %s21
      // Predicated region
      $region69: #{tpu_custom_call.1} parent=5 // pred_check
        %p1322 = pneg %p1321
      $region70: #{tpu_custom_call.1} parent=5 // pred_check_branch
        %1324 = sbr.rel (%p1322) target = $region72
      $region71: #{tpu_custom_call.1} parent=5 // pred_region
        %s1325 = ssub.s32 %s21, 2
        // Predicated region
        $region73: #{tpu_custom_call.1} parent=71 // pred_check
          %p1326 = pneg %p202
        $region74: #{tpu_custom_call.1} parent=71 // pred_check_branch
          %1328 = sbr.rel (%p1326) target = $region76
        $region75: #{tpu_custom_call.1} parent=71 // pred_region
          %s1329 = sand.u32 %s187, 1
          %s1330 = scalar_lea.sflag [#allocation4], %s1329
          %s1331 = sand.u32 %s187, 1
          %s1332 = smul.addr %s1331, 4
          %s1333 = scalar_lea.vmem [#allocation10], %s1332
          %1334 = dma.done %s1330, 64
        $region76: #{tpu_custom_call.1} parent=71 // pred_fallthru
          _
      $region72: #{tpu_custom_call.1} parent=5 // pred_fallthru
        _
    $region6: #{tpu_custom_call.1} parent=1 // loop_footer
      %s25 = sadd.s32 1, %s21
    $region7: #{tpu_custom_call.1} parent=1 // loop_footer_branch
      %20 = sbr.rel target = $region3
    $region8: #{tpu_custom_call.1} parent=1 // loop_exit
      _
    %1335 = vsyncpa [#allocation3], 1
    %s1336 = scalar_lea.sflag [#allocation3], 1
    %1337 = vsyncpa %s1336, 1
    %1338 = vsyncpa [#allocation6], 1
    %1339 = vsyncpa [#allocation9], 1
    %1340 = vsyncpa [#allocation4], 1
    %s1341 = scalar_lea.sflag [#allocation4], 1
    %1342 = vsyncpa %s1341, 1

</llo_original>
